<compile_context>
chip_gen: v6e
topology: v6e:2x2x1
jax: 0.10.0
libtpu: 0.0.40
codegen_flags: <defaults>
</compile_context>

<pallas_src>
import jax
import jax.numpy as jnp
from jax.experimental import pallas as pl
from jax.experimental.pallas import tpu as pltpu

FLOAT_MIN = -100000.0


def _bahdanau_kernel(q_ref, keys_ref, vals_ref, mask_ref,
                     wt_ref, b_ref, v_ref,
                     scores_ref, ctx_ref):
    # q_ref: (Bb, Q), keys_ref: (Bb, T, K), vals_ref: (Bb, T, V),
    # mask_ref: (Bb, T), wt_ref: (Q, K), b_ref/v_ref: (1, K)
    # scores_ref: (Bb, T), ctx_ref: (Bb, V)

    # Query projection on the MXU; bias folded in once for the whole tile.
    qp = jnp.dot(q_ref[...], wt_ref[...],
                 preferred_element_type=jnp.float32) + b_ref[...]      # (Bb, K)

    # energies[b, t] = sum_k tanh(keys[b,t,k] + qp[b,k]) * V_attr[k]
    t = jnp.tanh(keys_ref[...] + qp[:, None, :])                       # (Bb, T, K)
    e = jnp.sum(t * v_ref[...][None, :, :], axis=-1)                   # (Bb, T)

    # Mask exactly as in the PyTorch module (works for non-binary masks too).
    m = mask_ref[...]                                                  # (Bb, T)
    e = m * e + (1.0 - m) * FLOAT_MIN

    # Stable softmax over the time axis (matches F.softmax(energies, 1)).
    e_max = jnp.max(e, axis=-1, keepdims=True)                         # (Bb, 1)
    p = jnp.exp(e - e_max)                                             # (Bb, T)
    inv_denom = 1.0 / jnp.sum(p, axis=-1, keepdims=True)               # (Bb, 1)
    s = p * inv_denom                                                  # (Bb, T)

    scores_ref[...] = s
    # ctx[b, v] = sum_t values[b, t, v] * scores[b, t]
    ctx_ref[...] = jnp.sum(vals_ref[...] * s[:, :, None], axis=1)      # (Bb, V)


def _pick_block_b(B):
    """Largest power-of-two batch tile (<=128) that divides B, else whole B."""
    for cand in (128, 64, 32, 16, 8):
        if B % cand == 0:
            return cand
    return B


def bahdanau_attention_pallas(query, keys, values, kv_mask, params,
                              block_b=None):
    """query: (B, Q), keys: (B, T, K), values: (B, T, V), kv_mask: (B, T, 1).

    params: {'W_attr': (K, Q), 'b_attr': (K,), 'V_attr': (K,)} (PyTorch layout).
    Returns (scores (B, T, 1), ctx (B, V)).
    """
    B, Q = query.shape
    _, T, K = keys.shape
    V = values.shape[-1]

    if block_b is None:
        block_b = _pick_block_b(B)
    grid = (pl.cdiv(B, block_b),)

    wt = jnp.transpose(params["W_attr"])          # (Q, K): q @ W^T == q @ wt
    b2 = params["b_attr"].reshape(1, K)
    v2 = params["V_attr"].reshape(1, K)
    mask2 = kv_mask.reshape(B, T)                 # lane-dense along T

    scores2, ctx = pl.pallas_call(
        _bahdanau_kernel,
        out_shape=(jax.ShapeDtypeStruct((B, T), jnp.float32),
                   jax.ShapeDtypeStruct((B, V), jnp.float32)),
        grid_spec=pltpu.PrefetchScalarGridSpec(
            num_scalar_prefetch=0,
            grid=grid,
            in_specs=[
                pl.BlockSpec((block_b, Q), lambda b: (b, 0)),
                pl.BlockSpec((block_b, T, K), lambda b: (b, 0, 0)),
                pl.BlockSpec((block_b, T, V), lambda b: (b, 0, 0)),
                pl.BlockSpec((block_b, T), lambda b: (b, 0)),
                pl.BlockSpec((Q, K), lambda b: (0, 0)),
                pl.BlockSpec((1, K), lambda b: (0, 0)),
                pl.BlockSpec((1, K), lambda b: (0, 0)),
            ],
            out_specs=[
                pl.BlockSpec((block_b, T), lambda b: (b, 0)),
                pl.BlockSpec((block_b, V), lambda b: (b, 0)),
            ],
        ),
        compiler_params=pltpu.CompilerParams(
            dimension_semantics=("parallel",)),
    )(query, keys, values, mask2, wt, b2, v2)

    return scores2.reshape(B, T, 1), ctx


def _bahdanau_reference(query, keys, values, kv_mask, params):
    """Pure-JAX mirror of the PyTorch forward (for validation)."""
    W, b, v = params["W_attr"], params["b_attr"], params["V_attr"]
    qp = query @ W.T                                                    # (B, K)
    e = jnp.sum(jnp.tanh(keys + qp[:, None, :] + b) * v,
                axis=2, keepdims=True)                                  # (B, T, 1)
    e = kv_mask * e + (1.0 - kv_mask) * FLOAT_MIN
    s = jax.nn.softmax(e, axis=1)
    ctx = jnp.sum(values * s, axis=1)
    return s, ctx


def init_params(key, query_size, attr_key_size):
    stdv = 1.0 / jnp.sqrt(jnp.float32(attr_key_size))
    kv, kb, kw = jax.random.split(key, 3)
    return {
        "V_attr": jax.random.uniform(kv, (attr_key_size,), jnp.float32,
                                     -stdv, stdv),
        "b_attr": jax.random.uniform(kb, (attr_key_size,), jnp.float32,
                                     -stdv, stdv),
        "W_attr": jax.random.uniform(kw, (attr_key_size, query_size),
                                     jnp.float32, -stdv, stdv),
    }


if __name__ == "__main__":
    B, T, Q, K, V = 2, 8, 32, 32, 32
    key = jax.random.PRNGKey(0)
    k_q, k_k, k_v, k_p = jax.random.split(key, 4)

    query = jax.random.normal(k_q, (B, Q), jnp.float32)
    keys = jax.random.normal(k_k, (B, T, K), jnp.float32)
    values = jax.random.normal(k_v, (B, T, V), jnp.float32)
    # Binary mask: second sequence padded (zeros) for the last 3 steps.
    kv_mask = jnp.ones((B, T, 1), jnp.float32)
    kv_mask = kv_mask.at[1, T - 3:, :].set(0.0)
    params = init_params(k_p, Q, K)

    scores, ctx = bahdanau_attention_pallas(query, keys, values, kv_mask,
                                            params)
    scores = jax.block_until_ready(scores)
    ctx = jax.block_until_ready(ctx)

    ref_scores, ref_ctx = _bahdanau_reference(query, keys, values, kv_mask,
                                              params)

    assert scores.shape == (B, T, 1), scores.shape
    assert ctx.shape == (B, V), ctx.shape
    assert jnp.allclose(scores, ref_scores, atol=1e-5, rtol=1e-5), \
        float(jnp.max(jnp.abs(scores - ref_scores)))
    assert jnp.allclose(ctx, ref_ctx, atol=1e-5, rtol=1e-5), \
        float(jnp.max(jnp.abs(ctx - ref_ctx)))
    print("KERNEL_OK")
</pallas_src>

<mosaic_0001>
module attributes {stable_mosaic.version = 11 : i64} {
  func.func @_bahdanau_kernel(%arg0: i32, %arg1: memref<2x32xf32, #tpu.memory_space<vmem>>, %arg2: memref<2x8x32xf32, #tpu.memory_space<vmem>>, %arg3: memref<2x8x32xf32, #tpu.memory_space<vmem>>, %arg4: memref<2x8xf32, #tpu.memory_space<vmem>>, %arg5: memref<32x32xf32, #tpu.memory_space<vmem>>, %arg6: memref<1x32xf32, #tpu.memory_space<vmem>>, %arg7: memref<1x32xf32, #tpu.memory_space<vmem>>, %arg8: memref<2x8xf32, #tpu.memory_space<vmem>>, %arg9: memref<2x32xf32, #tpu.memory_space<vmem>>) attributes {dimension_semantics = [#tpu.dimension_semantics<parallel>], iteration_bounds = array<i64: 1>, scalar_prefetch = 0 : i64, scratch_operands = 0 : i64, tpu.core_type = #tpu.core_type<tc>, window_params = [{transform_indices = @transform_0, window_bounds = array<i64: 2, 32>}, {transform_indices = @transform_1, window_bounds = array<i64: 2, 8, 32>}, {transform_indices = @transform_2, window_bounds = array<i64: 2, 8, 32>}, {transform_indices = @transform_3, window_bounds = array<i64: 2, 8>}, {pipeline_mode = #tpu.pipeline_mode<synchronous>, transform_indices = @transform_4, window_bounds = array<i64: 32, 32>}, {pipeline_mode = #tpu.pipeline_mode<synchronous>, transform_indices = @transform_5, window_bounds = array<i64: 1, 32>}, {pipeline_mode = #tpu.pipeline_mode<synchronous>, transform_indices = @transform_6, window_bounds = array<i64: 1, 32>}, {transform_indices = @transform_7, window_bounds = array<i64: 2, 8>}, {transform_indices = @transform_8, window_bounds = array<i64: 2, 32>}]} {
    %c0 = arith.constant 0 : index
    %c0_0 = arith.constant 0 : index
    %0 = vector.load %arg1[%c0, %c0_0] : memref<2x32xf32, #tpu.memory_space<vmem>>, vector<2x32xf32>
    %c0_1 = arith.constant 0 : index
    %c0_2 = arith.constant 0 : index
    %1 = vector.load %arg5[%c0_1, %c0_2] : memref<32x32xf32, #tpu.memory_space<vmem>>, vector<32x32xf32>
    %cst = arith.constant dense<0.000000e+00> : vector<2x32xf32>
    %2 = tpu.matmul %0, %1, %cst {dimension_numbers = #tpu.dot_dimension_numbers<[1], [0], [0], [1], [0, 0, 1, 1], [], []>} : vector<2x32xf32>, vector<32x32xf32>, vector<2x32xf32> -> vector<2x32xf32>
    %c0_3 = arith.constant 0 : index
    %c0_4 = arith.constant 0 : index
    %3 = vector.load %arg6[%c0_3, %c0_4] : memref<1x32xf32, #tpu.memory_space<vmem>>, vector<1x32xf32>
    %4 = vector.broadcast %3 : vector<1x32xf32> to vector<2x32xf32>
    %5 = arith.addf %2, %4 : vector<2x32xf32>
    %c0_5 = arith.constant 0 : index
    %c0_6 = arith.constant 0 : index
    %c0_7 = arith.constant 0 : index
    %6 = vector.load %arg2[%c0_5, %c0_6, %c0_7] : memref<2x8x32xf32, #tpu.memory_space<vmem>>, vector<2x8x32xf32>
    %7 = vector.shape_cast %5 : vector<2x32xf32> to vector<2x1x32xf32>
    %8 = vector.broadcast %7 : vector<2x1x32xf32> to vector<2x8x32xf32>
    %9 = arith.addf %6, %8 : vector<2x8x32xf32>
    %10 = math.tanh %9 : vector<2x8x32xf32>
    %c0_8 = arith.constant 0 : index
    %c0_9 = arith.constant 0 : index
    %11 = vector.load %arg7[%c0_8, %c0_9] : memref<1x32xf32, #tpu.memory_space<vmem>>, vector<1x32xf32>
    %12 = vector.shape_cast %11 : vector<1x32xf32> to vector<1x1x32xf32>
    %13 = vector.broadcast %12 : vector<1x1x32xf32> to vector<2x8x32xf32>
    %14 = arith.mulf %10, %13 : vector<2x8x32xf32>
    %cst_10 = arith.constant dense<0.000000e+00> : vector<2x8xf32>
    %15 = vector.multi_reduction <add>, %14, %cst_10 [2] : vector<2x8x32xf32> to vector<2x8xf32>
    %c0_11 = arith.constant 0 : index
    %c0_12 = arith.constant 0 : index
    %16 = vector.load %arg4[%c0_11, %c0_12] : memref<2x8xf32, #tpu.memory_space<vmem>>, vector<2x8xf32>
    %17 = arith.mulf %16, %15 : vector<2x8xf32>
    %cst_13 = arith.constant 1.000000e+00 : f32
    %18 = vector.broadcast %cst_13 : f32 to vector<2x8xf32>
    %19 = arith.subf %18, %16 : vector<2x8xf32>
    %cst_14 = arith.constant -1.000000e+05 : f32
    %20 = vector.broadcast %cst_14 : f32 to vector<2x8xf32>
    %21 = arith.mulf %19, %20 : vector<2x8xf32>
    %22 = arith.addf %17, %21 : vector<2x8xf32>
    %cst_15 = arith.constant dense<0xFF800000> : vector<2xf32>
    %23 = vector.multi_reduction <maximumf>, %22, %cst_15 [1] : vector<2x8xf32> to vector<2xf32>
    %24 = vector.shape_cast %23 : vector<2xf32> to vector<2x1xf32>
    %25 = vector.broadcast %24 : vector<2x1xf32> to vector<2x8xf32>
    %26 = arith.subf %22, %25 : vector<2x8xf32>
    %27 = math.exp %26 : vector<2x8xf32>
    %cst_16 = arith.constant dense<0.000000e+00> : vector<2xf32>
    %28 = vector.multi_reduction <add>, %27, %cst_16 [1] : vector<2x8xf32> to vector<2xf32>
    %29 = vector.shape_cast %28 : vector<2xf32> to vector<2x1xf32>
    %cst_17 = arith.constant 1.000000e+00 : f32
    %30 = vector.broadcast %cst_17 : f32 to vector<2x1xf32>
    %31 = arith.divf %30, %29 : vector<2x1xf32>
    %32 = vector.broadcast %31 : vector<2x1xf32> to vector<2x8xf32>
    %33 = arith.mulf %27, %32 : vector<2x8xf32>
    %c0_18 = arith.constant 0 : index
    %c0_19 = arith.constant 0 : index
    %34 = vector.load %arg8[%c0_18, %c0_19] : memref<2x8xf32, #tpu.memory_space<vmem>>, vector<2x8xf32>
    tpu.vector_store %arg8[%c0_18, %c0_19], %33 {strides = array<i32>} : memref<2x8xf32, #tpu.memory_space<vmem>>, vector<2x8xf32>,
    %c0_20 = arith.constant 0 : index
    %c0_21 = arith.constant 0 : index
    %c0_22 = arith.constant 0 : index
    %35 = vector.load %arg3[%c0_20, %c0_21, %c0_22] : memref<2x8x32xf32, #tpu.memory_space<vmem>>, vector<2x8x32xf32>
    %36 = vector.shape_cast %33 : vector<2x8xf32> to vector<2x8x1xf32>
    %37 = vector.broadcast %36 : vector<2x8x1xf32> to vector<2x8x32xf32>
    %38 = arith.mulf %35, %37 : vector<2x8x32xf32>
    %cst_23 = arith.constant dense<0.000000e+00> : vector<2x32xf32>
    %39 = vector.multi_reduction <add>, %38, %cst_23 [1] : vector<2x8x32xf32> to vector<2x32xf32>
    %c0_24 = arith.constant 0 : index
    %c0_25 = arith.constant 0 : index
    %40 = vector.load %arg9[%c0_24, %c0_25] : memref<2x32xf32, #tpu.memory_space<vmem>>, vector<2x32xf32>
    tpu.vector_store %arg9[%c0_24, %c0_25], %39 {strides = array<i32>} : memref<2x32xf32, #tpu.memory_space<vmem>>, vector<2x32xf32>,
    return
  }
  func.func @transform_0(%arg0: i32) -> (i32, i32) {
    %c0_i32 = arith.constant 0 : i32
    %c0_i32_0 = arith.constant 0 : i32
    return %arg0, %c0_i32 : i32, i32
  }
  func.func @transform_1(%arg0: i32) -> (i32, i32, i32) {
    %c0_i32 = arith.constant 0 : i32
    %c0_i32_0 = arith.constant 0 : i32
    %c0_i32_1 = arith.constant 0 : i32
    return %arg0, %c0_i32, %c0_i32_0 : i32, i32, i32
  }
  func.func @transform_2(%arg0: i32) -> (i32, i32, i32) {
    %c0_i32 = arith.constant 0 : i32
    %c0_i32_0 = arith.constant 0 : i32
    %c0_i32_1 = arith.constant 0 : i32
    return %arg0, %c0_i32, %c0_i32_0 : i32, i32, i32
  }
  func.func @transform_3(%arg0: i32) -> (i32, i32) {
    %c0_i32 = arith.constant 0 : i32
    %c0_i32_0 = arith.constant 0 : i32
    return %arg0, %c0_i32 : i32, i32
  }
  func.func @transform_4(%arg0: i32) -> (i32, i32) {
    %c0_i32 = arith.constant 0 : i32
    %c0_i32_0 = arith.constant 0 : i32
    %c0_i32_1 = arith.constant 0 : i32
    return %c0_i32, %c0_i32_0 : i32, i32
  }
  func.func @transform_5(%arg0: i32) -> (i32, i32) {
    %c0_i32 = arith.constant 0 : i32
    %c0_i32_0 = arith.constant 0 : i32
    %c0_i32_1 = arith.constant 0 : i32
    return %c0_i32, %c0_i32_0 : i32, i32
  }
  func.func @transform_6(%arg0: i32) -> (i32, i32) {
    %c0_i32 = arith.constant 0 : i32
    %c0_i32_0 = arith.constant 0 : i32
    %c0_i32_1 = arith.constant 0 : i32
    return %c0_i32, %c0_i32_0 : i32, i32
  }
  func.func @transform_7(%arg0: i32) -> (i32, i32) {
    %c0_i32 = arith.constant 0 : i32
    %c0_i32_0 = arith.constant 0 : i32
    return %arg0, %c0_i32 : i32, i32
  }
  func.func @transform_8(%arg0: i32) -> (i32, i32) {
    %c0_i32 = arith.constant 0 : i32
    %c0_i32_0 = arith.constant 0 : i32
    return %arg0, %c0_i32 : i32, i32
  }
}

</mosaic_0001>

<llo_original>
// kernel: tpu_custom_call.1
$region0: #{tpu_custom_call.1}
  #allocation0 [shape = 'u32[]', space=smem, size = 0x4, offset = 0x4, fixed_abs, tag = 'smem constant byte address 0x4 - core index']
  #allocation1 [shape = 'u32[144,128]{1,0:T(1,128)}', space=vmem, size = 0x12000, scoped, tag = 'internal scratch']
  %s0 = inlined_call_operand.hbm [shape: f32[2,32], index: 0, kind: input, shape index: {}]
  %s1 = inlined_call_operand.hbm [shape: f32[2,8,32], index: 1, kind: input, shape index: {}]
  %s2 = inlined_call_operand.hbm [shape: f32[2,8,32], index: 2, kind: input, shape index: {}]
  %s3 = inlined_call_operand.vmem [shape: f32[2,8], index: 3, kind: input, shape index: {}]
  %s4 = inlined_call_operand.hbm [shape: f32[32,32], index: 4, kind: input, shape index: {}]
  %s5 = inlined_call_operand.vmem [shape: f32[1,32], index: 5, kind: input, shape index: {}]
  %s6 = inlined_call_operand.vmem [shape: f32[1,32], index: 6, kind: input, shape index: {}]
  %s7 = inlined_call_operand.hbm [shape: f32[2,8], index: 7, kind: output, shape index: {0}]
  %s8 = inlined_call_operand.hbm [shape: f32[2,32], index: 8, kind: output, shape index: {1}]
  %9 = xla_tuple %s7, %s8
  %s10 = sld [smem:[#allocation0]]
  $region62: #{tpu_custom_call.1} parent=0
    _
  %s12 = ssub.s32 1, %s10
  %s13 = scalar_select 0, %s12, %s10
  $region1: #{tpu_custom_call.1} parent=0
    #allocation2 [shape = 'u8[1024]{0}', space=vmem, size = 0x400, scoped, tag = 'input window, operand 0, single buffered']
    #allocation3 [shape = 's32[1]{0}', space=sflag, size = 0x4, scoped, tag = 'scoped memory for tpu_custom_call.1']
    #allocation4 [shape = 's32[1]{0}', space=sflag, size = 0x4, scoped, tag = 'scoped memory for tpu_custom_call.1']
    #allocation5 [shape = 'u8[8192]{0}', space=vmem, size = 0x2000, scoped, tag = 'input window, operand 1, single buffered']
    #allocation6 [shape = 's32[1]{0}', space=sflag, size = 0x4, scoped, tag = 'scoped memory for tpu_custom_call.1']
    #allocation7 [shape = 'u8[8192]{0}', space=vmem, size = 0x2000, scoped, tag = 'input window, operand 2, single buffered']
    #allocation8 [shape = 'u8[16384]{0}', space=vmem, size = 0x4000, scoped, tag = 'input window, operand 4, single buffered']
    #allocation9 [shape = 's32[1]{0}', space=sflag, size = 0x4, scoped, tag = 'scoped memory for tpu_custom_call.1']
    #allocation10 [shape = 'u8[1024]{0}', space=vmem, size = 0x400, scoped, tag = 'output window, operand 0, single buffered']
    #allocation11 [shape = 'u8[1024]{0}', space=vmem, size = 0x400, scoped, tag = 'output window, operand 1, single buffered']
    #allocation12 [shape = 's32[1]{0}', space=sflag, size = 0x4, scoped, tag = 'scoped memory for tpu_custom_call.1']
    %14 = vsyncpa [#allocation3], 0
    %15 = vsyncpa [#allocation6], 0
    %16 = vsyncpa [#allocation9], 0
    %17 = vsyncpa [#allocation4], 0
    %18 = vsyncpa [#allocation12], 0
    // Predicated region
    $region2: #{tpu_custom_call.1} parent=1 // pred_check
      _
    $region3: #{tpu_custom_call.1} parent=1 // pred_check_branch
      %20 = sbr.rel (0) target = $region5
    $region4: #{tpu_custom_call.1} parent=1 // pred_region
      %s22 = ssub.s32 32, 32
      %23 = vsyncadd [#allocation3], %s22
      %s25 = sshll.u32 [#allocation2], 4
      %s26 = int_to_ptr.vmem [resolvable:$true] %s25
      %28 = dma.hbm_to_vmem [thread:$0]  %s0, 32, %s26, [#allocation3]
    $region5: #{tpu_custom_call.1} parent=1 // pred_fallthru
      _
    // Predicated region
    $region6: #{tpu_custom_call.1} parent=1 // pred_check
      _
    $region7: #{tpu_custom_call.1} parent=1 // pred_check_branch
      %30 = sbr.rel (0) target = $region9
    $region8: #{tpu_custom_call.1} parent=1 // pred_region
      %s32 = ssub.s32 256, 256
      %33 = vsyncadd [#allocation6], %s32
      %s34 = sshll.u32 [#allocation5], 4
      %s35 = int_to_ptr.vmem [resolvable:$true] %s34
      %40 = dma.hbm_to_vmem [thread:$0]  %s1, 256, %s35, [#allocation6], 128, 128, 8
    $region9: #{tpu_custom_call.1} parent=1 // pred_fallthru
      _
    // Predicated region
    $region10: #{tpu_custom_call.1} parent=1 // pred_check
      _
    $region11: #{tpu_custom_call.1} parent=1 // pred_check_branch
      %42 = sbr.rel (0) target = $region13
    $region12: #{tpu_custom_call.1} parent=1 // pred_region
      %s44 = ssub.s32 256, 256
      %45 = vsyncadd [#allocation6], %s44
      %s46 = sshll.u32 [#allocation7], 4
      %s47 = int_to_ptr.vmem [resolvable:$true] %s46
      %52 = dma.hbm_to_vmem [thread:$0]  %s2, 256, %s47, [#allocation6], 128, 128, 8
    $region13: #{tpu_custom_call.1} parent=1 // pred_fallthru
      _
    // Predicated region
    $region14: #{tpu_custom_call.1} parent=1 // pred_check
      _
    $region15: #{tpu_custom_call.1} parent=1 // pred_check_branch
      %54 = sbr.rel (0) target = $region17
    $region16: #{tpu_custom_call.1} parent=1 // pred_region
      _
    $region17: #{tpu_custom_call.1} parent=1 // pred_fallthru
      _
    // Predicated region
    $region18: #{tpu_custom_call.1} parent=1 // pred_check
      _
    $region19: #{tpu_custom_call.1} parent=1 // pred_check_branch
      %56 = sbr.rel (0) target = $region21
    $region20: #{tpu_custom_call.1} parent=1 // pred_region
      %s58 = ssub.s32 512, 512
      %59 = vsyncadd [#allocation9], %s58
      %s60 = sshll.u32 [#allocation8], 4
      %s61 = int_to_ptr.vmem [resolvable:$true] %s60
      %66 = dma.hbm_to_vmem [thread:$0]  %s4, 512, %s61, [#allocation9], 128, 128, 8
    $region21: #{tpu_custom_call.1} parent=1 // pred_fallthru
      _
    // Predicated region
    $region22: #{tpu_custom_call.1} parent=1 // pred_check
      _
    $region23: #{tpu_custom_call.1} parent=1 // pred_check_branch
      %68 = sbr.rel (0) target = $region25
    $region24: #{tpu_custom_call.1} parent=1 // pred_region
      _
    $region25: #{tpu_custom_call.1} parent=1 // pred_fallthru
      _
    // Predicated region
    $region26: #{tpu_custom_call.1} parent=1 // pred_check
      _
    $region27: #{tpu_custom_call.1} parent=1 // pred_check_branch
      %70 = sbr.rel (0) target = $region29
    $region28: #{tpu_custom_call.1} parent=1 // pred_region
      _
    $region29: #{tpu_custom_call.1} parent=1 // pred_fallthru
      _
    // Predicated region
    $region30: #{tpu_custom_call.1} parent=1 // pred_check
      _
    $region31: #{tpu_custom_call.1} parent=1 // pred_check_branch
      %72 = sbr.rel (0) target = $region33
    $region32: #{tpu_custom_call.1} parent=1 // pred_region
      %73 = dma.done [#allocation3], 32
    $region33: #{tpu_custom_call.1} parent=1 // pred_fallthru
      _
    // Predicated region
    $region34: #{tpu_custom_call.1} parent=1 // pred_check
      _
    $region35: #{tpu_custom_call.1} parent=1 // pred_check_branch
      %75 = sbr.rel (0) target = $region37
    $region36: #{tpu_custom_call.1} parent=1 // pred_region
      %76 = dma.done [#allocation6], 256
    $region37: #{tpu_custom_call.1} parent=1 // pred_fallthru
      _
    // Predicated region
    $region38: #{tpu_custom_call.1} parent=1 // pred_check
      _
    $region39: #{tpu_custom_call.1} parent=1 // pred_check_branch
      %78 = sbr.rel (0) target = $region41
    $region40: #{tpu_custom_call.1} parent=1 // pred_region
      %79 = dma.done [#allocation6], 256
    $region41: #{tpu_custom_call.1} parent=1 // pred_fallthru
      _
    // Predicated region
    $region42: #{tpu_custom_call.1} parent=1 // pred_check
      _
    $region43: #{tpu_custom_call.1} parent=1 // pred_check_branch
      %81 = sbr.rel (0) target = $region45
    $region44: #{tpu_custom_call.1} parent=1 // pred_region
      %82 = dma.done [#allocation9], 512
    $region45: #{tpu_custom_call.1} parent=1 // pred_fallthru
      _
    %v83 = vld [vmem:[#allocation2] sm:$0x3]
    %v84 = vld [vmem:[#allocation8] sm:$0xff]
    %v85 = vld [vmem:[#allocation8 + $0x8] sm:$0xff]
    %v86 = vld [vmem:[#allocation8 + $0x10] sm:$0xff]
    %v87 = vld [vmem:[#allocation8 + $0x18] sm:$0xff]
    %v88 = vld [vmem:[%s5] sm:$0x1]
    %v90 = vlaneseq
    %v91 = vshrl.u32 %v90, 7
    %v92 = vsub.s32 0, %v91
    %v93 = vrot.slane %v88, %v92
    %vm95 = vcmask 261120
    %v97 = vsel %vm95, %v83, 0
    %99 = vmatprep.subr.mxu0 0.0
    %100 = vmatpush1.msra.mxu0 0.0
    %101 = vmatprep.subr.mxu0 0.0
    %102 = vmatpush1.msra.mxu0 0.0
    %103 = vmatprep.subr.mxu0 0.0
    %104 = vmatpush1.msra.mxu0 0.0
    %105 = vmatprep.subr.mxu0 0.0
    %106 = vmatpush1.msra.mxu0 0.0
    %107 = vmatprep.subr.mxu0 0.0
    %108 = vmatpush1.msra.mxu0 0.0
    %109 = vmatprep.subr.mxu0 0.0
    %110 = vmatpush1.msra.mxu0 0.0
    %111 = vmatprep.subr.mxu0 0.0
    %112 = vmatpush1.msra.mxu0 0.0
    %113 = vmatprep.subr.mxu0 0.0
    %114 = vmatpush1.msra.mxu0 0.0
    %115 = vmatprep.subr.mxu0 0.0
    %116 = vmatpush1.msra.mxu0 0.0
    %117 = vmatprep.subr.mxu0 0.0
    %118 = vmatpush1.msra.mxu0 0.0
    %119 = vmatprep.subr.mxu0 0.0
    %120 = vmatpush1.msra.mxu0 0.0
    %121 = vmatprep.subr.mxu0 0.0
    %122 = vmatpush1.msra.mxu0 0.0
    %123 = vmatprep.subr.mxu0 0.0
    %124 = vmatpush1.msra.mxu0 %v87
    %125 = vmatprep.subr.mxu0 0.0
    %126 = vmatpush1.msra.mxu0 %v86
    %127 = vmatprep.subr.mxu0 0.0
    %128 = vmatpush1.msra.mxu0 %v85
    %129 = vmatprep.subr.mxu0 0.0
    %130 = vmatpush1.msra.mxu0 %v84
    %131 = vmatprep.subr.mxu0 0.0
    %132 = vmatpush2.msra.mxu0 0.0
    %133 = vmatprep.subr.mxu0 0.0
    %134 = vmatpush2.msra.mxu0 0.0
    %135 = vmatprep.subr.mxu0 0.0
    %136 = vmatpush2.msra.mxu0 0.0
    %137 = vmatprep.subr.mxu0 0.0
    %138 = vmatpush2.msra.mxu0 0.0
    %139 = vmatprep.subr.mxu0 0.0
    %140 = vmatpush2.msra.mxu0 0.0
    %141 = vmatprep.subr.mxu0 0.0
    %142 = vmatpush2.msra.mxu0 0.0
    %143 = vmatprep.subr.mxu0 0.0
    %144 = vmatpush2.msra.mxu0 0.0
    %145 = vmatprep.subr.mxu0 0.0
    %146 = vmatpush2.msra.mxu0 0.0
    %147 = vmatprep.subr.mxu0 0.0
    %148 = vmatpush2.msra.mxu0 0.0
    %149 = vmatprep.subr.mxu0 0.0
    %150 = vmatpush2.msra.mxu0 0.0
    %151 = vmatprep.subr.mxu0 0.0
    %152 = vmatpush2.msra.mxu0 0.0
    %153 = vmatprep.subr.mxu0 0.0
    %154 = vmatpush2.msra.mxu0 0.0
    %155 = vmatprep.subr.mxu0 0.0
    %156 = vmatpush2.msra.mxu0 0.0
    %157 = vmatprep.subr.mxu0 0.0
    %158 = vmatpush2.msra.mxu0 0.0
    %159 = vmatprep.subr.mxu0 0.0
    %160 = vmatpush2.msra.mxu0 0.0
    %161 = vmatprep.subr.mxu0 0.0
    %162 = vmatpush2.msra.mxu0 0.0
    %163 = vmatprep.mubr.f32.mxu0 0.0
    %164 = vmatmul.mubr.f32.gmra.mxu0 %v97
    %v165 = vpop.f32.mrf.mxu0
    %v166 = vadd.f32 %v93, %v165
    %v167 = vpop.f32.mrf.mxu0
    %168 = vdwg.mxu0
    %v169 = vld [vmem:[#allocation5] sm:$0xff]
    %v170 = vld [vmem:[#allocation5 + $0x8] sm:$0xff]
    %v173 = vunpack.c.l.s4 1966171168
    %v174 = vunpack.c.0.s8 %v173
    %v175 = vlaneseq
    %v176 = vshrl.u32 %v175, 7
    %v177 = vsub.s32 %v174, %v176
    %v178 = vrot.slane %v166, %v177
    %v179 = vcombine.high %v178, %v178
    %v181 = vunpack.c.l.s4 1966171168
    %v182 = vunpack.c.0.s8 %v181
    %v183 = vlaneseq
    %v184 = vshrl.u32 %v183, 7
    %v185 = vsub.s32 %v182, %v184
    %v186 = vrot.slane %v178, %v185
    %v188 = vunpack.c.l.s4 1966171168
    %v189 = vunpack.c.0.s8 %v188
    %v190 = vlaneseq
    %v191 = vshrl.u32 %v190, 7
    %v192 = vsub.s32 %v189, %v191
    %v193 = vrot.slane %v179, %v192
    %v194 = vlaneseq
    %v195 = vshrl.u32 %v194, 7
    %v196 = vsub.s32 0, %v195
    %v197 = vrot.slane %v186, %v196
    %v198 = vlaneseq
    %v199 = vshrl.u32 %v198, 7
    %v200 = vsub.s32 0, %v199
    %v201 = vrot.slane %v193, %v200
    %v204 = vadd.f32 %v169, %v197
    %v205 = vadd.f32 %v170, %v201
    %v206 = vtanh.pop %v204
    %v207 = vtanh.pop %v205
    %v208 = vld [vmem:[%s6] sm:$0x1]
    %v210 = vlaneseq
    %v211 = vshrl.u32 %v210, 7
    %v212 = vsub.s32 0, %v211
    %v213 = vrot.slane %v208, %v212
    %v215 = vmul.f32 %v206, %v213
    %v216 = vmul.f32 %v207, %v213
    %v217 = vsel %vm95, %v215, 0.0
    %218 = vadd.xlane.f32.xlu0 %v217
    %v219 = vpop.xlane.xlu0 %218
    %v220 = vsel %vm95, %v216, 0.0
    %221 = vadd.xlane.f32.xlu0 %v220
    %v222 = vpop.xlane.xlu0 %221
    %v223 = vld [vmem:[%s3] sm:$0x3]
    %v226 = vlaneseq
    %v227 = vand.u32 %v226, 127
    %v228 = vlaneseq
    %v229 = vshrl.u32 %v228, 7
    %v230 = vsub.s32 %v227, %v229
    %v231 = vrot.slane %v219, %v230
    %v232 = vlaneseq
    %v233 = vshrl.u32 %v232, 7
    %v234 = vsub.s32 %v227, %v233
    %v235 = vrot.slane %v222, %v234
    %vm236 = vcmask 1041409
    %v237 = vsel %vm236, %v235, %v231
    %v239 = vmul.f32 %v223, %v237
    %v240 = vsub.f32 1.0, %v223
    %v241 = vmul.f32 %v240, -100000.0
    %v242 = vadd.f32 %v239, %v241
    %vm243 = vcmask 58368
    %v244 = vsel %vm243, %v242, -inf
    %245 = vmax.xlane.f32.xlu0 %v244
    %v246 = vpop.xlane.xlu0 %245
    %v247 = vsub.f32 %v242, %v246
    %v248 = vmul.f32 %v247, 1.442695
    %v249 = vpow.pop %v248
    %v250 = vsel %vm243, %v249, 0.0
    %251 = vadd.xlane.f32.xlu0 %v250
    %v252 = vpop.xlane.xlu0 %251
    %v253 = vrcp.pop %v252
    %v254 = vmul.f32 1.0, %v253
    %v255 = vmul.f32 %v249, %v254
    %256 = vst.msk [vmem:[#allocation10] sm:$0x3] %vm243, %v255
    %v257 = vld [vmem:[#allocation7] sm:$0xff]
    %v258 = vld [vmem:[#allocation7 + $0x8] sm:$0xff]
    %v259 = vlaneseq
    %v260 = vshrl.u32 %v259, 7
    %v261 = vsub.s32 0, %v260
    %v262 = vrot.slane %v255, %v261
    %264 = vbcast.lane.b32.xlu0 %v262, 256
    %v265 = vpop.permute.xlu0 %264
    %v266 = vlaneseq
    %v267 = vshrl.u32 %v266, 7
    %v268 = vsub.s32 1, %v267
    %v269 = vrot.slane %v255, %v268
    %271 = vbcast.lane.b32.xlu0 %v269, 256
    %v272 = vpop.permute.xlu0 %271
    %v273 = vmul.f32 %v257, %v265
    %v274 = vmul.f32 %v258, %v272
    %v275 = vsel %vm95, %v273, 0.0
    %v276 = vrot.slane %v275, 4
    %v277 = vadd.f32 %v275, %v276
    %v278 = vrot.slane %v277, 2
    %v279 = vadd.f32 %v277, %v278
    %v280 = vrot.slane %v279, 1
    %v281 = vadd.f32 %v279, %v280
    %v282 = vsel %vm95, %v274, 0.0
    %v283 = vrot.slane %v282, 4
    %v284 = vadd.f32 %v282, %v283
    %v285 = vrot.slane %v284, 2
    %v286 = vadd.f32 %v284, %v285
    %v287 = vrot.slane %v286, 1
    %v288 = vadd.f32 %v286, %v287
    %v291 = vsel %vm236, %v288, %v281
    %vm293 = vcmask 254976
    %294 = vst.msk [vmem:[#allocation11] sm:$0x3] %vm293, %v291
    // Predicated region
    $region46: #{tpu_custom_call.1} parent=1 // pred_check
      _
    $region47: #{tpu_custom_call.1} parent=1 // pred_check_branch
      %296 = sbr.rel (0) target = $region49
    $region48: #{tpu_custom_call.1} parent=1 // pred_region
      %s298 = ssub.s32 32, 32
      %299 = vsyncadd [#allocation4], %s298
      %s301 = sshll.u32 [#allocation10], 4
      %s302 = int_to_ptr.vmem [resolvable:$true] %s301
      %304 = dma.vmem_to_hbm [thread:$0]  %s302, 32, %s7, [#allocation4]
    $region49: #{tpu_custom_call.1} parent=1 // pred_fallthru
      _
    // Predicated region
    $region50: #{tpu_custom_call.1} parent=1 // pred_check
      _
    $region51: #{tpu_custom_call.1} parent=1 // pred_check_branch
      %306 = sbr.rel (0) target = $region53
    $region52: #{tpu_custom_call.1} parent=1 // pred_region
      %s308 = ssub.s32 32, 32
      %309 = vsyncadd [#allocation12], %s308
      %s311 = sshll.u32 [#allocation11], 4
      %s312 = int_to_ptr.vmem [resolvable:$true] %s311
      %314 = dma.vmem_to_hbm [thread:$0]  %s312, 32, %s8, [#allocation12]
    $region53: #{tpu_custom_call.1} parent=1 // pred_fallthru
      _
    // Predicated region
    $region54: #{tpu_custom_call.1} parent=1 // pred_check
      _
    $region55: #{tpu_custom_call.1} parent=1 // pred_check_branch
      %316 = sbr.rel (0) target = $region57
    $region56: #{tpu_custom_call.1} parent=1 // pred_region
      %317 = dma.done [#allocation4], 32
    $region57: #{tpu_custom_call.1} parent=1 // pred_fallthru
      _
    // Predicated region
    $region58: #{tpu_custom_call.1} parent=1 // pred_check
      _
    $region59: #{tpu_custom_call.1} parent=1 // pred_check_branch
      %319 = sbr.rel (0) target = $region61
    $region60: #{tpu_custom_call.1} parent=1 // pred_region
      %320 = dma.done [#allocation12], 32
    $region61: #{tpu_custom_call.1} parent=1 // pred_fallthru
      _
    %321 = vsyncpa [#allocation3], 1
    %322 = vsyncpa [#allocation6], 1
    %323 = vsyncpa [#allocation9], 1
    %324 = vsyncpa [#allocation4], 1
    %325 = vsyncpa [#allocation12], 1

</llo_original>
